<compile_context>
chip_gen: v6e
topology: v6e:2x2x1
jax: 0.10.0
libtpu: 0.0.40
codegen_flags: <defaults>
</compile_context>

<pallas_src>
import jax
import jax.numpy as jnp
from jax import lax
from jax.experimental import pallas as pl
from jax.experimental.pallas import tpu as pltpu

B, S, H = 2, 8, 32          # batch, max_seq_len, hidden_size (small synthetic sizes)


# ------------------------------ Fused Pallas kernel ------------------------------ #

def _emma_fused_kernel(sen_ref, des_ref, em_ref, w_ref, b_ref,
                       sen_vec_ref, des_vec_ref, loss_ref):
    i = pl.program_id(0)
    bt, s_len, h = sen_ref.shape
    row0 = pl.multiple_of(i * bt, bt)
    rows = pl.ds(row0, bt)
    f32 = jnp.float32

    # ---- get_sen_vec: [CLS, max(e1*seq), max(e2*seq)] ---------------------------- #
    # Single load of the sen tile; both masked max-pools come from ONE traversal of it
    # (masks arrive pre-stacked as (BT, 2, S) from the wrapper).
    sen = sen_ref[...]                                        # (BT, S, H) input dtype
    cls_s = sen[:, 0, :].astype(f32)                          # (BT, H)
    masks = em_ref[...].astype(sen.dtype)                     # (BT, 2, S)
    ent = jnp.max(masks[:, :, :, None] * sen[:, None, :, :], axis=2)   # (BT, 2, H)

    # Direct lane-slice stores (no (BT,3H) concatenate temporary).
    sen_vec_ref[rows, pl.ds(0, h)] = cls_s
    sen_vec_ref[rows, pl.ds(h, h)] = ent[:, 0, :].astype(f32)
    sen_vec_ref[rows, pl.ds(2 * h, h)] = ent[:, 1, :].astype(f32)

    # ---- get_des_vec: [CLS, attn_pool1, attn_pool2] ------------------------------ #
    des = des_ref[...]                                        # (BT, S, H) input dtype
    cls_d = des[:, 0, :].astype(f32)

    # Both score sets in ONE MXU dot: stacked weights (2, H) broadcast over the batch and
    # contracted against des on the last axis ('bnh,bsh->bns' == flash 'bqd,bkd->bqk').
    w_b = jnp.broadcast_to(w_ref[...].astype(des.dtype)[None, :, :], (bt, 2, h))
    scores = jnp.einsum('bnh,bsh->bns', w_b, des,
                        preferred_element_type=f32)           # (BT, 2, S) lane-dense in S
    scores = scores + b_ref[...].astype(f32)[None, :, :]      # bias (2, S); slot 0 is dummy

    # Token 0 (CLS) is excluded from the pool: mask it out of the softmax instead of
    # slicing des[:, 1:, :] (which would force a sublane-offset relayout copy).
    tok = lax.broadcasted_iota(jnp.int32, scores.shape, 2)
    scores = jnp.where(tok == 0, jnp.float32(-1e30), scores)
    m = jnp.max(scores, axis=-1, keepdims=True)
    p = jnp.exp(scores - m)
    p = p / jnp.sum(p, axis=-1, keepdims=True)                # softmax over S; token 0 -> 0

    # Both pools in ONE batched MXU contraction over S ('bns,bsh->bnh' == flash 'bqk,bkd->bqd').
    pooled = jnp.einsum('bns,bsh->bnh', p.astype(des.dtype), des,
                        preferred_element_type=f32)           # (BT, 2, H)

    des_vec_ref[rows, pl.ds(0, h)] = cls_d
    des_vec_ref[rows, pl.ds(h, h)] = pooled[:, 0, :]
    des_vec_ref[rows, pl.ds(2 * h, h)] = pooled[:, 1, :]

    # ---- contrastive CE over the full batch (last grid step only) ---------------- #
    # sen_vec / des_vec output blocks use a constant block index, so they stay VMEM-resident
    # across the whole batch grid (no HBM round trip before this stage).
    @pl.when(i == pl.num_programs(0) - 1)
    def _():
        sv = sen_vec_ref[...]                                 # (B, 3H) f32
        dv = des_vec_ref[...]                                 # (B, 3H) f32
        bsz = sv.shape[0]
        # num[i, j] = sv[i] . dv[j]  -- contract last axes directly (no dv.T materialization).
        num = lax.dot_general(sv, dv, (((1,), (1,)), ((), ())),
                              preferred_element_type=f32)     # (B, B)
        # 1 / max(||x||, 1e-8): torch CosineSimilarity clamps EACH norm separately.
        inv_s = jnp.minimum(lax.rsqrt(jnp.sum(sv * sv, axis=-1, keepdims=True)),
                            jnp.float32(1e8))                 # (B, 1)
        inv_d = jnp.minimum(lax.rsqrt(jnp.sum(dv * dv, axis=-1, keepdims=True)),
                            jnp.float32(1e8))                 # (B, 1)
        # temperature 0.02 -> multiply by 50.
        logits = num * inv_s * inv_d.T * jnp.float32(50.0)    # (B, B)
        # Positive logit extracted from the SAME logits matrix (diagonal), so it carries the
        # exact same rounding as the reference's logits[i, i].
        r = lax.broadcasted_iota(jnp.int32, (bsz, bsz), 0)
        c = lax.broadcasted_iota(jnp.int32, (bsz, bsz), 1)
        pos = jnp.sum(jnp.where(r == c, logits, jnp.float32(0.0)),
                      axis=-1, keepdims=True)                 # (B, 1)
        mm = jnp.max(logits, axis=-1, keepdims=True)
        lse = jnp.log(jnp.sum(jnp.exp(logits - mm), axis=-1, keepdims=True)) + mm
        # CrossEntropyLoss mean reduction folded in -> single (1,1) output.
        loss_ref[...] = jnp.sum(lse - pos, axis=0, keepdims=True) * jnp.float32(1.0 / bsz)


# ------------------------------------ Wrapper ------------------------------------- #

def _emma_pallas(sen_output, des_output, ent_masks, w_stacked, b_stacked, *, batch_tile):
    b, s, h = sen_output.shape
    assert b % batch_tile == 0
    nb = b // batch_tile
    isz = sen_output.dtype.itemsize

    grid_spec = pltpu.PrefetchScalarGridSpec(
        num_scalar_prefetch=0,
        grid=(nb,),
        in_specs=[
            pl.BlockSpec((batch_tile, s, h), lambda i: (i, 0, 0)),    # sen_output
            pl.BlockSpec((batch_tile, s, h), lambda i: (i, 0, 0)),    # des_output
            pl.BlockSpec((batch_tile, 2, s), lambda i: (i, 0, 0)),    # stacked entity masks
            pl.BlockSpec((2, h), lambda i: (0, 0)),                   # stacked pool weights
            pl.BlockSpec((2, s), lambda i: (0, 0)),                   # stacked pool biases
        ],
        out_specs=(
            pl.BlockSpec((b, 3 * h), lambda i: (0, 0)),               # sen_vec (VMEM-resident)
            pl.BlockSpec((b, 3 * h), lambda i: (0, 0)),               # des_vec (VMEM-resident)
            pl.BlockSpec((1, 1), lambda i: (0, 0)),                   # mean CE loss
        ),
    )

    # Advisory cost estimate (lets XLA schedule neighbors around the custom call).
    flops = 3 * (2 * b * 2 * s * h) + 2 * b * b * 3 * h + 10 * b * b
    transcendentals = 2 * b * s + b * b + 2 * b
    bytes_accessed = (2 * b * s * h * isz + b * 2 * s * 4 + 2 * h * 4 + 2 * s * 4
                      + 2 * b * 3 * h * 4 + 4)
    cost = pl.CostEstimate(flops=flops, transcendentals=transcendentals,
                           bytes_accessed=bytes_accessed)

    sen_vec, des_vec, loss = pl.pallas_call(
        _emma_fused_kernel,
        grid_spec=grid_spec,
        out_shape=(
            jax.ShapeDtypeStruct((b, 3 * h), jnp.float32),
            jax.ShapeDtypeStruct((b, 3 * h), jnp.float32),
            jax.ShapeDtypeStruct((1, 1), jnp.float32),
        ),
        compiler_params=pltpu.CompilerParams(
            # The contrastive CE at the last step reads the full VMEM-resident
            # sen_vec/des_vec accumulators -> the batch axis must be sequential.
            # (v7x: prefer a two-call split with a "parallel" pooling kernel instead.)
            dimension_semantics=("arbitrary",),
            # Explicit scoped-VMEM budget (v5e default is only 16 MiB); re-derive per
            # generation for BERT-scale tiles (v7x has 64 MiB physical).
            vmem_limit_bytes=32 * 1024 * 1024,
        ),
        cost_estimate=cost,
    )(sen_output, des_output, ent_masks, w_stacked, b_stacked)
    return loss[0, 0], sen_vec, des_vec


@jax.jit
def emma_forward(sen_output, des_output, marked_e1, marked_e2,
                 des_w1, des_b1, des_w2, des_b2):
    b, s, h = sen_output.shape
    f32 = jnp.float32
    # Wrapper-side (free) parameter plumbing:
    #   * weights (H,1) x2 -> one stacked lane-dense (2, H) operand for a single MXU dot.
    #   * biases (S-1,1) x2 -> one (2, S) lane-dense array with a dummy slot for token 0
    #     (token 0 is masked out of the softmax inside the kernel).
    #   * entity masks -> one stacked (B, 2, S) array so both max-pools share one sen pass.
    w_stacked = jnp.concatenate([des_w1.astype(f32).reshape(1, h),
                                 des_w2.astype(f32).reshape(1, h)], axis=0)     # (2, H)
    b_stacked = jnp.concatenate(
        [jnp.zeros((2, 1), f32),
         jnp.concatenate([des_b1.astype(f32).reshape(1, s - 1),
                          des_b2.astype(f32).reshape(1, s - 1)], axis=0)],
        axis=1)                                                                  # (2, S)
    ent_masks = jnp.stack([marked_e1, marked_e2], axis=1).astype(f32)            # (B, 2, S)
    # Whole batch per grid step at these toy sizes; for real (B, 512, 768) inputs use an
    # 8-multiple row tile sized to per-chip VMEM (v7x: 64 MiB, v5e/v6e: 128 MiB) and keep
    # the (B, 3H) accumulators in range (or split the CE into a second call).
    batch_tile = b
    return _emma_pallas(sen_output, des_output, ent_masks, w_stacked, b_stacked,
                        batch_tile=batch_tile)


# ------------------------------ Pure-JAX reference -------------------------------- #

def _reference(sen_output, des_output, e1, e2, w1, b1, w2, b2):
    def extract_entity(seq, m):
        return jnp.max(m[..., None] * seq, axis=-2)

    sen_vec = jnp.concatenate(
        [sen_output[:, 0, :], extract_entity(sen_output, e1),
         extract_entity(sen_output, e2)], axis=-1)

    body = des_output[:, 1:, :]

    def pool(w, b):
        sc = jnp.squeeze(jnp.einsum('bsh,ho->bso', body, w), -1) + b[:, 0][None, :]
        p = jax.nn.softmax(sc, axis=-1)
        return jnp.sum(p[..., None] * body, axis=1)

    des_vec = jnp.concatenate(
        [des_output[:, 0, :], pool(w1, b1), pool(w2, b2)], axis=-1)

    num = sen_vec @ des_vec.T
    ns = jnp.maximum(jnp.linalg.norm(sen_vec, axis=-1, keepdims=True), 1e-8)
    nd = jnp.maximum(jnp.linalg.norm(des_vec, axis=-1, keepdims=True), 1e-8)
    logits = (num / (ns * nd.T)) / 0.02
    n = logits.shape[0]
    lse = jax.scipy.special.logsumexp(logits, axis=-1)
    loss = jnp.mean(lse - logits[jnp.arange(n), jnp.arange(n)])
    return loss, sen_vec, des_vec


# ---------------------------------------- Main ------------------------------------ #

if __name__ == "__main__":
    key = jax.random.PRNGKey(0)
    k1, k2, k3, k4 = jax.random.split(key, 4)

    # Synthetic "BERT last_hidden_state" features and entity marker masks.
    sen_output = jax.random.normal(k1, (B, S, H), dtype=jnp.float32)
    des_output = jax.random.normal(k2, (B, S, H), dtype=jnp.float32)
    marked_e1 = jax.random.bernoulli(k3, 0.3, (B, S)).astype(jnp.float32)
    marked_e2 = jax.random.bernoulli(k4, 0.3, (B, S)).astype(jnp.float32)

    # Parameters exactly as in EMMA.__init__ (deterministic ones / zeros).
    des_w1 = jnp.ones((H, 1), dtype=jnp.float32)
    des_b1 = jnp.zeros((S - 1, 1), dtype=jnp.float32)
    des_w2 = jnp.ones((H, 1), dtype=jnp.float32)
    des_b2 = jnp.zeros((S - 1, 1), dtype=jnp.float32)

    loss, sen_vec, des_vec = emma_forward(
        sen_output, des_output, marked_e1, marked_e2,
        des_w1, des_b1, des_w2, des_b2)
    jax.block_until_ready((loss, sen_vec, des_vec))

    ref_loss, ref_sen, ref_des = _reference(
        sen_output, des_output, marked_e1, marked_e2,
        des_w1, des_b1, des_w2, des_b2)

    assert jnp.allclose(sen_vec, ref_sen, rtol=1e-4, atol=1e-4)
    assert jnp.allclose(des_vec, ref_des, rtol=1e-4, atol=1e-4)
    assert jnp.allclose(loss, ref_loss, rtol=1e-3, atol=1e-3)

    print("KERNEL_OK")
</pallas_src>

<mosaic_0001>
module attributes {stable_mosaic.version = 11 : i64} {
  func.func @_emma_fused_kernel(%arg0: i32, %arg1: memref<2x8x32xf32, #tpu.memory_space<vmem>>, %arg2: memref<2x8x32xf32, #tpu.memory_space<vmem>>, %arg3: memref<2x2x8xf32, #tpu.memory_space<vmem>>, %arg4: memref<2x32xf32, #tpu.memory_space<vmem>>, %arg5: memref<2x8xf32, #tpu.memory_space<vmem>>, %arg6: memref<2x96xf32, #tpu.memory_space<vmem>>, %arg7: memref<2x96xf32, #tpu.memory_space<vmem>>, %arg8: memref<1x1xf32, #tpu.memory_space<vmem>>) attributes {dimension_semantics = [#tpu.dimension_semantics<arbitrary>], iteration_bounds = array<i64: 1>, scalar_prefetch = 0 : i64, scratch_operands = 0 : i64, tpu.core_type = #tpu.core_type<tc>, window_params = [{transform_indices = @transform_0, window_bounds = array<i64: 2, 8, 32>}, {transform_indices = @transform_1, window_bounds = array<i64: 2, 8, 32>}, {transform_indices = @transform_2, window_bounds = array<i64: 2, 2, 8>}, {pipeline_mode = #tpu.pipeline_mode<synchronous>, transform_indices = @transform_3, window_bounds = array<i64: 2, 32>}, {pipeline_mode = #tpu.pipeline_mode<synchronous>, transform_indices = @transform_4, window_bounds = array<i64: 2, 8>}, {pipeline_mode = #tpu.pipeline_mode<synchronous>, transform_indices = @transform_5, window_bounds = array<i64: 2, 96>}, {pipeline_mode = #tpu.pipeline_mode<synchronous>, transform_indices = @transform_6, window_bounds = array<i64: 2, 96>}, {pipeline_mode = #tpu.pipeline_mode<synchronous>, transform_indices = @transform_7, window_bounds = array<i64: 1, 1>}]} {
    %c2_i32 = arith.constant 2 : i32
    %0 = arith.muli %arg0, %c2_i32 : i32
    %1 = tpu.assume_multiple %0, 2 : i32
    %c0 = arith.constant 0 : index
    %c0_0 = arith.constant 0 : index
    %c0_1 = arith.constant 0 : index
    %2 = vector.load %arg1[%c0, %c0_0, %c0_1] : memref<2x8x32xf32, #tpu.memory_space<vmem>>, vector<2x8x32xf32>
    %3 = vector.extract_strided_slice %2 {offsets = [0, 0, 0], sizes = [2, 1, 32], strides = [1, 1, 1]} : vector<2x8x32xf32> to vector<2x1x32xf32>
    %4 = vector.shape_cast %3 : vector<2x1x32xf32> to vector<2x32xf32>
    %c0_2 = arith.constant 0 : index
    %c0_3 = arith.constant 0 : index
    %c0_4 = arith.constant 0 : index
    %5 = vector.load %arg3[%c0_2, %c0_3, %c0_4] : memref<2x2x8xf32, #tpu.memory_space<vmem>>, vector<2x2x8xf32>
    %6 = vector.shape_cast %5 : vector<2x2x8xf32> to vector<2x2x8x1xf32>
    %7 = vector.shape_cast %2 : vector<2x8x32xf32> to vector<2x1x8x32xf32>
    %8 = vector.broadcast %6 : vector<2x2x8x1xf32> to vector<2x2x8x32xf32>
    %9 = vector.broadcast %7 : vector<2x1x8x32xf32> to vector<2x2x8x32xf32>
    %10 = arith.mulf %8, %9 : vector<2x2x8x32xf32>
    %cst = arith.constant dense<0xFF800000> : vector<2x2x32xf32>
    %11 = vector.multi_reduction <maximumf>, %10, %cst [2] : vector<2x2x8x32xf32> to vector<2x2x32xf32>
    %12 = arith.index_cast %1 : i32 to index
    %c0_5 = arith.constant 0 : index
    %13 = vector.load %arg6[%12, %c0_5] : memref<2x96xf32, #tpu.memory_space<vmem>>, vector<2x32xf32>
    tpu.vector_store %arg6[%12, %c0_5], %4 {strides = array<i32>} : memref<2x96xf32, #tpu.memory_space<vmem>>, vector<2x32xf32>,
    %14 = vector.extract_strided_slice %11 {offsets = [0, 0, 0], sizes = [2, 1, 32], strides = [1, 1, 1]} : vector<2x2x32xf32> to vector<2x1x32xf32>
    %15 = vector.shape_cast %14 : vector<2x1x32xf32> to vector<2x32xf32>
    %16 = arith.index_cast %1 : i32 to index
    %c32 = arith.constant 32 : index
    %17 = vector.load %arg6[%16, %c32] : memref<2x96xf32, #tpu.memory_space<vmem>>, vector<2x32xf32>
    tpu.vector_store %arg6[%16, %c32], %15 {strides = array<i32>} : memref<2x96xf32, #tpu.memory_space<vmem>>, vector<2x32xf32>,
    %18 = vector.extract_strided_slice %11 {offsets = [0, 1, 0], sizes = [2, 1, 32], strides = [1, 1, 1]} : vector<2x2x32xf32> to vector<2x1x32xf32>
    %19 = vector.shape_cast %18 : vector<2x1x32xf32> to vector<2x32xf32>
    %20 = arith.index_cast %1 : i32 to index
    %c64 = arith.constant 64 : index
    %21 = vector.load %arg6[%20, %c64] : memref<2x96xf32, #tpu.memory_space<vmem>>, vector<2x32xf32>
    tpu.vector_store %arg6[%20, %c64], %19 {strides = array<i32>} : memref<2x96xf32, #tpu.memory_space<vmem>>, vector<2x32xf32>,
    %c0_6 = arith.constant 0 : index
    %c0_7 = arith.constant 0 : index
    %c0_8 = arith.constant 0 : index
    %22 = vector.load %arg2[%c0_6, %c0_7, %c0_8] : memref<2x8x32xf32, #tpu.memory_space<vmem>>, vector<2x8x32xf32>
    %23 = vector.extract_strided_slice %22 {offsets = [0, 0, 0], sizes = [2, 1, 32], strides = [1, 1, 1]} : vector<2x8x32xf32> to vector<2x1x32xf32>
    %24 = vector.shape_cast %23 : vector<2x1x32xf32> to vector<2x32xf32>
    %c0_9 = arith.constant 0 : index
    %c0_10 = arith.constant 0 : index
    %25 = vector.load %arg4[%c0_9, %c0_10] : memref<2x32xf32, #tpu.memory_space<vmem>>, vector<2x32xf32>
    %26 = vector.shape_cast %25 : vector<2x32xf32> to vector<1x2x32xf32>
    %27 = vector.shape_cast %26 : vector<1x2x32xf32> to vector<1x2x32xf32>
    %28 = vector.broadcast %27 : vector<1x2x32xf32> to vector<2x2x32xf32>
    "tpu.trace_start"() <{level = 10 : i32, message = "bnh,bsh->bns"}> : () -> ()
    %cst_11 = arith.constant dense<0.000000e+00> : vector<2x2x8xf32>
    %29 = tpu.matmul %28, %22, %cst_11 {dimension_numbers = #tpu.dot_dimension_numbers<[2], [2], [1], [1], [0, 0, 0, 1, 1, 1], [0], [0]>} : vector<2x2x32xf32>, vector<2x8x32xf32>, vector<2x2x8xf32> -> vector<2x2x8xf32>
    "tpu.trace_stop"() : () -> ()
    %c0_12 = arith.constant 0 : index
    %c0_13 = arith.constant 0 : index
    %30 = vector.load %arg5[%c0_12, %c0_13] : memref<2x8xf32, #tpu.memory_space<vmem>>, vector<2x8xf32>
    %31 = vector.shape_cast %30 : vector<2x8xf32> to vector<1x2x8xf32>
    %32 = vector.broadcast %31 : vector<1x2x8xf32> to vector<2x2x8xf32>
    %33 = arith.addf %29, %32 : vector<2x2x8xf32>
    %34 = tpu.iota {dimensions = array<i32: 2>} : vector<2x2x8xi32>
    %c0_i32 = arith.constant 0 : i32
    %35 = vector.broadcast %c0_i32 : i32 to vector<2x2x8xi32>
    %36 = arith.cmpi eq, %34, %35 : vector<2x2x8xi32>
    %cst_14 = arith.constant -1.000000e+30 : f32
    %37 = vector.broadcast %cst_14 : f32 to vector<2x2x8xf32>
    %38 = arith.select %36, %37, %33 : vector<2x2x8xi1>, vector<2x2x8xf32>
    %cst_15 = arith.constant dense<0xFF800000> : vector<2x2xf32>
    %39 = vector.multi_reduction <maximumf>, %38, %cst_15 [2] : vector<2x2x8xf32> to vector<2x2xf32>
    %40 = vector.shape_cast %39 : vector<2x2xf32> to vector<2x2x1xf32>
    %41 = vector.broadcast %40 : vector<2x2x1xf32> to vector<2x2x8xf32>
    %42 = arith.subf %38, %41 : vector<2x2x8xf32>
    %43 = math.exp %42 : vector<2x2x8xf32>
    %cst_16 = arith.constant dense<0.000000e+00> : vector<2x2xf32>
    %44 = vector.multi_reduction <add>, %43, %cst_16 [2] : vector<2x2x8xf32> to vector<2x2xf32>
    %45 = vector.shape_cast %44 : vector<2x2xf32> to vector<2x2x1xf32>
    %46 = vector.broadcast %45 : vector<2x2x1xf32> to vector<2x2x8xf32>
    %47 = arith.divf %43, %46 : vector<2x2x8xf32>
    "tpu.trace_start"() <{level = 10 : i32, message = "bns,bsh->bnh"}> : () -> ()
    %cst_17 = arith.constant dense<0.000000e+00> : vector<2x2x32xf32>
    %48 = tpu.matmul %47, %22, %cst_17 {dimension_numbers = #tpu.dot_dimension_numbers<[2], [1], [1], [2], [0, 0, 0, 1, 1, 2], [0], [0]>} : vector<2x2x8xf32>, vector<2x8x32xf32>, vector<2x2x32xf32> -> vector<2x2x32xf32>
    "tpu.trace_stop"() : () -> ()
    %49 = arith.index_cast %1 : i32 to index
    %c0_18 = arith.constant 0 : index
    %50 = vector.load %arg7[%49, %c0_18] : memref<2x96xf32, #tpu.memory_space<vmem>>, vector<2x32xf32>
    tpu.vector_store %arg7[%49, %c0_18], %24 {strides = array<i32>} : memref<2x96xf32, #tpu.memory_space<vmem>>, vector<2x32xf32>,
    %51 = vector.extract_strided_slice %48 {offsets = [0, 0, 0], sizes = [2, 1, 32], strides = [1, 1, 1]} : vector<2x2x32xf32> to vector<2x1x32xf32>
    %52 = vector.shape_cast %51 : vector<2x1x32xf32> to vector<2x32xf32>
    %53 = arith.index_cast %1 : i32 to index
    %c32_19 = arith.constant 32 : index
    %54 = vector.load %arg7[%53, %c32_19] : memref<2x96xf32, #tpu.memory_space<vmem>>, vector<2x32xf32>
    tpu.vector_store %arg7[%53, %c32_19], %52 {strides = array<i32>} : memref<2x96xf32, #tpu.memory_space<vmem>>, vector<2x32xf32>,
    %55 = vector.extract_strided_slice %48 {offsets = [0, 1, 0], sizes = [2, 1, 32], strides = [1, 1, 1]} : vector<2x2x32xf32> to vector<2x1x32xf32>
    %56 = vector.shape_cast %55 : vector<2x1x32xf32> to vector<2x32xf32>
    %57 = arith.index_cast %1 : i32 to index
    %c64_20 = arith.constant 64 : index
    %58 = vector.load %arg7[%57, %c64_20] : memref<2x96xf32, #tpu.memory_space<vmem>>, vector<2x32xf32>
    tpu.vector_store %arg7[%57, %c64_20], %56 {strides = array<i32>} : memref<2x96xf32, #tpu.memory_space<vmem>>, vector<2x32xf32>,
    %c0_i32_21 = arith.constant 0 : i32
    %59 = arith.cmpi eq, %arg0, %c0_i32_21 : i32
    %60 = arith.extui %59 : i1 to i32
    %c0_i32_22 = arith.constant 0 : i32
    %61 = arith.cmpi ne, %60, %c0_i32_22 : i32
    scf.if %61 {
      %c0_23 = arith.constant 0 : index
      %c0_24 = arith.constant 0 : index
      %62 = vector.load %arg6[%c0_23, %c0_24] : memref<2x96xf32, #tpu.memory_space<vmem>>, vector<2x96xf32>
      %c0_25 = arith.constant 0 : index
      %c0_26 = arith.constant 0 : index
      %63 = vector.load %arg7[%c0_25, %c0_26] : memref<2x96xf32, #tpu.memory_space<vmem>>, vector<2x96xf32>
      %cst_27 = arith.constant dense<0.000000e+00> : vector<2x2xf32>
      %64 = tpu.matmul %62, %63, %cst_27 {dimension_numbers = #tpu.dot_dimension_numbers<[1], [1], [0], [0], [0, 0, 1, 0], [], []>} : vector<2x96xf32>, vector<2x96xf32>, vector<2x2xf32> -> vector<2x2xf32>
      %65 = arith.mulf %62, %62 : vector<2x96xf32>
      %cst_28 = arith.constant dense<0.000000e+00> : vector<2xf32>
      %66 = vector.multi_reduction <add>, %65, %cst_28 [1] : vector<2x96xf32> to vector<2xf32>
      %67 = vector.shape_cast %66 : vector<2xf32> to vector<2x1xf32>
      %68 = math.rsqrt %67 : vector<2x1xf32>
      %cst_29 = arith.constant 1.000000e+08 : f32
      %69 = vector.broadcast %cst_29 : f32 to vector<2x1xf32>
      %70 = arith.minimumf %68, %69 : vector<2x1xf32>
      %71 = arith.mulf %63, %63 : vector<2x96xf32>
      %cst_30 = arith.constant dense<0.000000e+00> : vector<2xf32>
      %72 = vector.multi_reduction <add>, %71, %cst_30 [1] : vector<2x96xf32> to vector<2xf32>
      %73 = vector.shape_cast %72 : vector<2xf32> to vector<2x1xf32>
      %74 = math.rsqrt %73 : vector<2x1xf32>
      %cst_31 = arith.constant 1.000000e+08 : f32
      %75 = vector.broadcast %cst_31 : f32 to vector<2x1xf32>
      %76 = arith.minimumf %74, %75 : vector<2x1xf32>
      %77 = vector.broadcast %70 : vector<2x1xf32> to vector<2x2xf32>
      %78 = arith.mulf %64, %77 : vector<2x2xf32>
      %79 = tpu.transpose %76, [1, 0] : vector<2x1xf32> -> vector<1x2xf32>
      %80 = vector.broadcast %79 : vector<1x2xf32> to vector<2x2xf32>
      %81 = arith.mulf %78, %80 : vector<2x2xf32>
      %cst_32 = arith.constant 5.000000e+01 : f32
      %82 = vector.broadcast %cst_32 : f32 to vector<2x2xf32>
      %83 = arith.mulf %81, %82 : vector<2x2xf32>
      %84 = tpu.iota {dimensions = array<i32: 0>} : vector<2x2xi32>
      %85 = tpu.iota {dimensions = array<i32: 1>} : vector<2x2xi32>
      %86 = arith.cmpi eq, %84, %85 : vector<2x2xi32>
      %cst_33 = arith.constant 0.000000e+00 : f32
      %87 = vector.broadcast %cst_33 : f32 to vector<2x2xf32>
      %88 = arith.select %86, %83, %87 : vector<2x2xi1>, vector<2x2xf32>
      %cst_34 = arith.constant dense<0.000000e+00> : vector<2xf32>
      %89 = vector.multi_reduction <add>, %88, %cst_34 [1] : vector<2x2xf32> to vector<2xf32>
      %90 = vector.shape_cast %89 : vector<2xf32> to vector<2x1xf32>
      %cst_35 = arith.constant dense<0xFF800000> : vector<2xf32>
      %91 = vector.multi_reduction <maximumf>, %83, %cst_35 [1] : vector<2x2xf32> to vector<2xf32>
      %92 = vector.shape_cast %91 : vector<2xf32> to vector<2x1xf32>
      %93 = vector.broadcast %92 : vector<2x1xf32> to vector<2x2xf32>
      %94 = arith.subf %83, %93 : vector<2x2xf32>
      %95 = math.exp %94 : vector<2x2xf32>
      %cst_36 = arith.constant dense<0.000000e+00> : vector<2xf32>
      %96 = vector.multi_reduction <add>, %95, %cst_36 [1] : vector<2x2xf32> to vector<2xf32>
      %97 = vector.shape_cast %96 : vector<2xf32> to vector<2x1xf32>
      %98 = math.log %97 : vector<2x1xf32>
      %99 = arith.addf %98, %92 : vector<2x1xf32>
      %100 = arith.subf %99, %90 : vector<2x1xf32>
      %cst_37 = arith.constant dense<0.000000e+00> : vector<1xf32>
      %101 = vector.multi_reduction <add>, %100, %cst_37 [0] : vector<2x1xf32> to vector<1xf32>
      %102 = vector.shape_cast %101 : vector<1xf32> to vector<1x1xf32>
      %cst_38 = arith.constant 5.000000e-01 : f32
      %103 = vector.broadcast %cst_38 : f32 to vector<1x1xf32>
      %104 = arith.mulf %102, %103 : vector<1x1xf32>
      %c0_39 = arith.constant 0 : index
      %c0_40 = arith.constant 0 : index
      %105 = vector.load %arg8[%c0_39, %c0_40] : memref<1x1xf32, #tpu.memory_space<vmem>>, vector<1x1xf32>
      tpu.vector_store %arg8[%c0_39, %c0_40], %104 {strides = array<i32>} : memref<1x1xf32, #tpu.memory_space<vmem>>, vector<1x1xf32>,
    } else {
    }
    return
  }
  func.func @transform_0(%arg0: i32) -> (i32, i32, i32) {
    %c0_i32 = arith.constant 0 : i32
    %c0_i32_0 = arith.constant 0 : i32
    %c0_i32_1 = arith.constant 0 : i32
    return %arg0, %c0_i32, %c0_i32_0 : i32, i32, i32
  }
  func.func @transform_1(%arg0: i32) -> (i32, i32, i32) {
    %c0_i32 = arith.constant 0 : i32
    %c0_i32_0 = arith.constant 0 : i32
    %c0_i32_1 = arith.constant 0 : i32
    return %arg0, %c0_i32, %c0_i32_0 : i32, i32, i32
  }
  func.func @transform_2(%arg0: i32) -> (i32, i32, i32) {
    %c0_i32 = arith.constant 0 : i32
    %c0_i32_0 = arith.constant 0 : i32
    %c0_i32_1 = arith.constant 0 : i32
    return %arg0, %c0_i32, %c0_i32_0 : i32, i32, i32
  }
  func.func @transform_3(%arg0: i32) -> (i32, i32) {
    %c0_i32 = arith.constant 0 : i32
    %c0_i32_0 = arith.constant 0 : i32
    %c0_i32_1 = arith.constant 0 : i32
    return %c0_i32, %c0_i32_0 : i32, i32
  }
  func.func @transform_4(%arg0: i32) -> (i32, i32) {
    %c0_i32 = arith.constant 0 : i32
    %c0_i32_0 = arith.constant 0 : i32
    %c0_i32_1 = arith.constant 0 : i32
    return %c0_i32, %c0_i32_0 : i32, i32
  }
  func.func @transform_5(%arg0: i32) -> (i32, i32) {
    %c0_i32 = arith.constant 0 : i32
    %c0_i32_0 = arith.constant 0 : i32
    %c0_i32_1 = arith.constant 0 : i32
    return %c0_i32, %c0_i32_0 : i32, i32
  }
  func.func @transform_6(%arg0: i32) -> (i32, i32) {
    %c0_i32 = arith.constant 0 : i32
    %c0_i32_0 = arith.constant 0 : i32
    %c0_i32_1 = arith.constant 0 : i32
    return %c0_i32, %c0_i32_0 : i32, i32
  }
  func.func @transform_7(%arg0: i32) -> (i32, i32) {
    %c0_i32 = arith.constant 0 : i32
    %c0_i32_0 = arith.constant 0 : i32
    %c0_i32_1 = arith.constant 0 : i32
    return %c0_i32, %c0_i32_0 : i32, i32
  }
}

</mosaic_0001>

<llo_original>
// kernel: emma_forward.1
$region0: #{emma_forward.1}
  #allocation0 [shape = 'u32[]', space=smem, size = 0x4, offset = 0x4, fixed_abs, tag = 'smem constant byte address 0x4 - core index']
  #allocation1 [shape = 'u32[144,128]{1,0:T(1,128)}', space=vmem, size = 0x12000, scoped, tag = 'internal scratch']
  %s0 = inlined_call_operand.vmem [shape: f32[2,8,32], index: 0, kind: input, shape index: {}]
  %s1 = inlined_call_operand.hbm [shape: f32[2,8,32], index: 1, kind: input, shape index: {}]
  %s2 = inlined_call_operand.vmem [shape: f32[2,2,8], index: 2, kind: input, shape index: {}]
  %s3 = inlined_call_operand.vmem [shape: f32[2,32], index: 3, kind: input, shape index: {}]
  %s4 = inlined_call_operand.vmem [shape: f32[2,8], index: 4, kind: input, shape index: {}]
  %s5 = inlined_call_operand.hbm [shape: f32[2,96], index: 5, kind: output, shape index: {0}]
  %s6 = inlined_call_operand.hbm [shape: f32[2,96], index: 6, kind: output, shape index: {1}]
  %s7 = inlined_call_operand.hbm [shape: f32[1,1], index: 7, kind: output, shape index: {2}]
  %8 = xla_tuple %s5, %s6, %s7
  %s9 = sld [smem:[#allocation0]]
  $region54: #{emma_forward.1} parent=0
    _
  %s11 = ssub.s32 1, %s9
  %s12 = scalar_select 0, %s11, %s9
  $region1: #{emma_forward.1} parent=0
    #allocation2 [shape = 'u8[8192]{0}', space=vmem, size = 0x2000, scoped, tag = 'input window, operand 1, single buffered']
    #allocation3 [shape = 's32[1]{0}', space=sflag, size = 0x4, scoped, tag = 'scoped memory for emma_forward.1']
    #allocation4 [shape = 's32[1]{0}', space=sflag, size = 0x4, scoped, tag = 'scoped memory for emma_forward.1']
    #allocation5 [shape = 'u8[1024]{0}', space=vmem, size = 0x400, scoped, tag = 'output window, operand 0, single buffered']
    #allocation6 [shape = 'u8[1024]{0}', space=vmem, size = 0x400, scoped, tag = 'output window, operand 1, single buffered']
    #allocation7 [shape = 's32[1]{0}', space=sflag, size = 0x4, scoped, tag = 'scoped memory for emma_forward.1']
    #allocation8 [shape = 'u8[512]{0}', space=vmem, size = 0x400, scoped, tag = 'output window, operand 2, single buffered']
    %13 = vsyncpa [#allocation3], 0
    %14 = vsyncpa [#allocation4], 0
    %15 = vsyncpa [#allocation7], 0
    // Predicated region
    $region2: #{emma_forward.1} parent=1 // pred_check
      _
    $region3: #{emma_forward.1} parent=1 // pred_check_branch
      %17 = sbr.rel (0) target = $region5
    $region4: #{emma_forward.1} parent=1 // pred_region
      _
    $region5: #{emma_forward.1} parent=1 // pred_fallthru
      _
    // Predicated region
    $region6: #{emma_forward.1} parent=1 // pred_check
      _
    $region7: #{emma_forward.1} parent=1 // pred_check_branch
      %19 = sbr.rel (0) target = $region9
    $region8: #{emma_forward.1} parent=1 // pred_region
      %s21 = ssub.s32 256, 256
      %22 = vsyncadd [#allocation3], %s21
      %s23 = sshll.u32 [#allocation2], 4
      %s24 = int_to_ptr.vmem [resolvable:$true] %s23
      %29 = dma.hbm_to_vmem [thread:$0]  %s1, 256, %s24, [#allocation3], 128, 128, 8
    $region9: #{emma_forward.1} parent=1 // pred_fallthru
      _
    // Predicated region
    $region10: #{emma_forward.1} parent=1 // pred_check
      _
    $region11: #{emma_forward.1} parent=1 // pred_check_branch
      %31 = sbr.rel (0) target = $region13
    $region12: #{emma_forward.1} parent=1 // pred_region
      _
    $region13: #{emma_forward.1} parent=1 // pred_fallthru
      _
    // Predicated region
    $region14: #{emma_forward.1} parent=1 // pred_check
      _
    $region15: #{emma_forward.1} parent=1 // pred_check_branch
      %33 = sbr.rel (0) target = $region17
    $region16: #{emma_forward.1} parent=1 // pred_region
      _
    $region17: #{emma_forward.1} parent=1 // pred_fallthru
      _
    // Predicated region
    $region18: #{emma_forward.1} parent=1 // pred_check
      _
    $region19: #{emma_forward.1} parent=1 // pred_check_branch
      %35 = sbr.rel (0) target = $region21
    $region20: #{emma_forward.1} parent=1 // pred_region
      _
    $region21: #{emma_forward.1} parent=1 // pred_fallthru
      _
    // Predicated region
    $region22: #{emma_forward.1} parent=1 // pred_check
      _
    $region23: #{emma_forward.1} parent=1 // pred_check_branch
      %37 = sbr.rel (0) target = $region25
    $region24: #{emma_forward.1} parent=1 // pred_region
      %38 = dma.done [#allocation3], 256
    $region25: #{emma_forward.1} parent=1 // pred_fallthru
      _
    %s39 = smul.u32 0, 2
    %v40 = vld [vmem:[%s0] sm:$0xff]
    %v41 = vld [vmem:[%s0 + $0x8] sm:$0xff]
    %v42 = vld [vmem:[%s2] sm:$0x3]
    %v43 = vld [vmem:[%s2 + $0x2] sm:$0x3]
    %v44 = vlaneseq
    %v45 = vshrl.u32 %v44, 7
    %v46 = vsub.s32 0, %v45
    %v47 = vrot.slane %v42, %v46
    %49 = vbcast.lane.b32.xlu0 %v47, 256
    %v50 = vpop.permute.xlu0 %49
    %v51 = vlaneseq
    %v52 = vshrl.u32 %v51, 7
    %v53 = vsub.s32 1, %v52
    %v54 = vrot.slane %v42, %v53
    %56 = vbcast.lane.b32.xlu0 %v54, 256
    %v57 = vpop.permute.xlu0 %56
    %v58 = vlaneseq
    %v59 = vshrl.u32 %v58, 7
    %v60 = vsub.s32 0, %v59
    %v61 = vrot.slane %v43, %v60
    %63 = vbcast.lane.b32.xlu0 %v61, 256
    %v64 = vpop.permute.xlu0 %63
    %v65 = vlaneseq
    %v66 = vshrl.u32 %v65, 7
    %v67 = vsub.s32 1, %v66
    %v68 = vrot.slane %v43, %v67
    %70 = vbcast.lane.b32.xlu0 %v68, 256
    %v71 = vpop.permute.xlu0 %70
    %v72 = vmul.f32 %v50, %v40
    %v73 = vmul.f32 %v57, %v40
    %v74 = vmul.f32 %v64, %v41
    %v75 = vmul.f32 %v71, %v41
    %vm76 = vcmask 261120
    %v77 = vsel %vm76, %v72, -inf
    %v78 = vrot.slane %v77, 4
    %v79 = vmax.f32 %v77, %v78
    %v80 = vrot.slane %v79, 2
    %v81 = vmax.f32 %v79, %v80
    %v82 = vrot.slane %v81, 1
    %v83 = vmax.f32 %v81, %v82
    %v84 = vsel %vm76, %v73, -inf
    %v85 = vrot.slane %v84, 4
    %v86 = vmax.f32 %v84, %v85
    %v87 = vrot.slane %v86, 2
    %v88 = vmax.f32 %v86, %v87
    %v89 = vrot.slane %v88, 1
    %v90 = vmax.f32 %v88, %v89
    %v91 = vsel %vm76, %v74, -inf
    %v92 = vrot.slane %v91, 4
    %v93 = vmax.f32 %v91, %v92
    %v94 = vrot.slane %v93, 2
    %v95 = vmax.f32 %v93, %v94
    %v96 = vrot.slane %v95, 1
    %v97 = vmax.f32 %v95, %v96
    %v98 = vsel %vm76, %v75, -inf
    %v99 = vrot.slane %v98, 4
    %v100 = vmax.f32 %v98, %v99
    %v101 = vrot.slane %v100, 2
    %v102 = vmax.f32 %v100, %v101
    %v103 = vrot.slane %v102, 1
    %v104 = vmax.f32 %v102, %v103
    %v107 = vrot.slane %v41, 7
    %vm108 = vcmask 1041409
    %v109 = vsel %vm108, %v107, %v40
    %s111 = scalar_lea.vmem [#allocation5], %s39
    %vm112 = vcmask 254976
    %113 = vst.msk [vmem:[%s111] sm:$0x3] %vm112, %v109
    %v116 = vsel %vm108, %v97, %v83
    %117 = vrot.lane.b32.xlu0 %v116, 32
    %v118 = vpop.permute.xlu0 %117
    %vm120 = vcmask 517376
    %121 = vst.msk [vmem:[%s111] sm:$0x3] %vm120, %v118
    %v124 = vsel %vm108, %v104, %v90
    %125 = vrot.lane.b32.xlu0 %v124, 64
    %v126 = vpop.permute.xlu0 %125
    %vm128 = vcmask 779776
    %129 = vst.msk [vmem:[%s111] sm:$0x3] %vm128, %v126
    %v130 = vld [vmem:[#allocation2] sm:$0xff]
    %v131 = vld [vmem:[#allocation2 + $0x8] sm:$0xff]
    %v132 = vld [vmem:[%s3] sm:$0x3]
    %v133 = vld [vmem:[%s4] sm:$0x3]
    %v135 = vsel %vm76, %v132, 0
    %v138 = vsel %vm76, %v130, 0
    %140 = vmatprep.subr.mxu0 0.0
    %141 = vmatpush1.xpose.msra.mxu0 0.0
    %142 = vmatprep.subr.mxu0 0.0
    %143 = vmatpush1.xpose.msra.mxu0 0.0
    %144 = vmatprep.subr.mxu0 0.0
    %145 = vmatpush1.xpose.msra.mxu0 0.0
    %146 = vmatprep.subr.mxu0 0.0
    %147 = vmatpush1.xpose.msra.mxu0 0.0
    %148 = vmatprep.subr.mxu0 0.0
    %149 = vmatpush1.xpose.msra.mxu0 0.0
    %150 = vmatprep.subr.mxu0 0.0
    %151 = vmatpush1.xpose.msra.mxu0 0.0
    %152 = vmatprep.subr.mxu0 0.0
    %153 = vmatpush1.xpose.msra.mxu0 0.0
    %154 = vmatprep.subr.mxu0 0.0
    %155 = vmatpush1.xpose.msra.mxu0 0.0
    %156 = vmatprep.subr.mxu0 0.0
    %157 = vmatpush1.xpose.msra.mxu0 0.0
    %158 = vmatprep.subr.mxu0 0.0
    %159 = vmatpush1.xpose.msra.mxu0 0.0
    %160 = vmatprep.subr.mxu0 0.0
    %161 = vmatpush1.xpose.msra.mxu0 0.0
    %162 = vmatprep.subr.mxu0 0.0
    %163 = vmatpush1.xpose.msra.mxu0 0.0
    %164 = vmatprep.subr.mxu0 0.0
    %165 = vmatpush1.xpose.msra.mxu0 0.0
    %166 = vmatprep.subr.mxu0 0.0
    %167 = vmatpush1.xpose.msra.mxu0 0.0
    %168 = vmatprep.subr.mxu0 0.0
    %169 = vmatpush1.xpose.msra.mxu0 0.0
    %170 = vmatprep.subr.mxu0 0.0
    %171 = vmatpush1.xpose.msra.mxu0 %v138
    %172 = vmatprep.subr.mxu0 0.0
    %173 = vmatpush2.xpose.msra.mxu0 0.0
    %174 = vmatprep.subr.mxu0 0.0
    %175 = vmatpush2.xpose.msra.mxu0 0.0
    %176 = vmatprep.subr.mxu0 0.0
    %177 = vmatpush2.xpose.msra.mxu0 0.0
    %178 = vmatprep.subr.mxu0 0.0
    %179 = vmatpush2.xpose.msra.mxu0 0.0
    %180 = vmatprep.subr.mxu0 0.0
    %181 = vmatpush2.xpose.msra.mxu0 0.0
    %182 = vmatprep.subr.mxu0 0.0
    %183 = vmatpush2.xpose.msra.mxu0 0.0
    %184 = vmatprep.subr.mxu0 0.0
    %185 = vmatpush2.xpose.msra.mxu0 0.0
    %186 = vmatprep.subr.mxu0 0.0
    %187 = vmatpush2.xpose.msra.mxu0 0.0
    %188 = vmatprep.subr.mxu0 0.0
    %189 = vmatpush2.xpose.msra.mxu0 0.0
    %190 = vmatprep.subr.mxu0 0.0
    %191 = vmatpush2.xpose.msra.mxu0 0.0
    %192 = vmatprep.subr.mxu0 0.0
    %193 = vmatpush2.xpose.msra.mxu0 0.0
    %194 = vmatprep.subr.mxu0 0.0
    %195 = vmatpush2.xpose.msra.mxu0 0.0
    %196 = vmatprep.subr.mxu0 0.0
    %197 = vmatpush2.xpose.msra.mxu0 0.0
    %198 = vmatprep.subr.mxu0 0.0
    %199 = vmatpush2.xpose.msra.mxu0 0.0
    %200 = vmatprep.subr.mxu0 0.0
    %201 = vmatpush2.xpose.msra.mxu0 0.0
    %202 = vmatprep.subr.mxu0 0.0
    %203 = vmatpush2.xpose.msra.mxu0 0.0
    %204 = vmatprep.mubr.f32.mxu0 0.0
    %205 = vmatmul.mubr.f32.gmra.mxu0 %v135
    %v206 = vpop.f32.mrf.mxu0
    %v207 = vadd.f32 %v133, %v206
    %v208 = vpop.f32.mrf.mxu0
    %209 = vdwg.mxu0
    %v211 = vsel %vm76, %v131, 0
    %213 = vmatprep.subr.mxu0 0.0
    %214 = vmatpush1.xpose.msra.mxu0 0.0
    %215 = vmatprep.subr.mxu0 0.0
    %216 = vmatpush1.xpose.msra.mxu0 0.0
    %217 = vmatprep.subr.mxu0 0.0
    %218 = vmatpush1.xpose.msra.mxu0 0.0
    %219 = vmatprep.subr.mxu0 0.0
    %220 = vmatpush1.xpose.msra.mxu0 0.0
    %221 = vmatprep.subr.mxu0 0.0
    %222 = vmatpush1.xpose.msra.mxu0 0.0
    %223 = vmatprep.subr.mxu0 0.0
    %224 = vmatpush1.xpose.msra.mxu0 0.0
    %225 = vmatprep.subr.mxu0 0.0
    %226 = vmatpush1.xpose.msra.mxu0 0.0
    %227 = vmatprep.subr.mxu0 0.0
    %228 = vmatpush1.xpose.msra.mxu0 0.0
    %229 = vmatprep.subr.mxu0 0.0
    %230 = vmatpush1.xpose.msra.mxu0 0.0
    %231 = vmatprep.subr.mxu0 0.0
    %232 = vmatpush1.xpose.msra.mxu0 0.0
    %233 = vmatprep.subr.mxu0 0.0
    %234 = vmatpush1.xpose.msra.mxu0 0.0
    %235 = vmatprep.subr.mxu0 0.0
    %236 = vmatpush1.xpose.msra.mxu0 0.0
    %237 = vmatprep.subr.mxu0 0.0
    %238 = vmatpush1.xpose.msra.mxu0 0.0
    %239 = vmatprep.subr.mxu0 0.0
    %240 = vmatpush1.xpose.msra.mxu0 0.0
    %241 = vmatprep.subr.mxu0 0.0
    %242 = vmatpush1.xpose.msra.mxu0 0.0
    %243 = vmatprep.subr.mxu0 0.0
    %244 = vmatpush1.xpose.msra.mxu0 %v211
    %245 = vmatprep.subr.mxu0 0.0
    %246 = vmatpush2.xpose.msra.mxu0 0.0
    %247 = vmatprep.subr.mxu0 0.0
    %248 = vmatpush2.xpose.msra.mxu0 0.0
    %249 = vmatprep.subr.mxu0 0.0
    %250 = vmatpush2.xpose.msra.mxu0 0.0
    %251 = vmatprep.subr.mxu0 0.0
    %252 = vmatpush2.xpose.msra.mxu0 0.0
    %253 = vmatprep.subr.mxu0 0.0
    %254 = vmatpush2.xpose.msra.mxu0 0.0
    %255 = vmatprep.subr.mxu0 0.0
    %256 = vmatpush2.xpose.msra.mxu0 0.0
    %257 = vmatprep.subr.mxu0 0.0
    %258 = vmatpush2.xpose.msra.mxu0 0.0
    %259 = vmatprep.subr.mxu0 0.0
    %260 = vmatpush2.xpose.msra.mxu0 0.0
    %261 = vmatprep.subr.mxu0 0.0
    %262 = vmatpush2.xpose.msra.mxu0 0.0
    %263 = vmatprep.subr.mxu0 0.0
    %264 = vmatpush2.xpose.msra.mxu0 0.0
    %265 = vmatprep.subr.mxu0 0.0
    %266 = vmatpush2.xpose.msra.mxu0 0.0
    %267 = vmatprep.subr.mxu0 0.0
    %268 = vmatpush2.xpose.msra.mxu0 0.0
    %269 = vmatprep.subr.mxu0 0.0
    %270 = vmatpush2.xpose.msra.mxu0 0.0
    %271 = vmatprep.subr.mxu0 0.0
    %272 = vmatpush2.xpose.msra.mxu0 0.0
    %273 = vmatprep.subr.mxu0 0.0
    %274 = vmatpush2.xpose.msra.mxu0 0.0
    %275 = vmatprep.subr.mxu0 0.0
    %276 = vmatpush2.xpose.msra.mxu0 0.0
    %277 = vmatprep.mubr.f32.mxu0 0.0
    %278 = vmatmul.mubr.f32.gmra.mxu0 %v135
    %v279 = vpop.f32.mrf.mxu0
    %v280 = vadd.f32 %v133, %v279
    %v281 = vpop.f32.mrf.mxu0
    %282 = vdwg.mxu0
    %v283 = vlaneseq
    %v284 = vand.u32 %v283, 127
    %vm285 = vcmp.eq.s32.totalorder %v284, 0
    %v286 = vsel %vm285, -1e+30, %v207
    %v287 = vsel %vm285, -1e+30, %v280
    %vm288 = vcmask 58368
    %v289 = vsel %vm288, %v286, -inf
    %290 = vmax.xlane.f32.xlu0 %v289
    %v291 = vpop.xlane.xlu0 %290
    %v292 = vsel %vm288, %v287, -inf
    %293 = vmax.xlane.f32.xlu0 %v292
    %v294 = vpop.xlane.xlu0 %293
    %v295 = vsub.f32 %v286, %v291
    %v296 = vsub.f32 %v287, %v294
    %v297 = vmul.f32 %v295, 1.442695
    %v298 = vpow.pop %v297
    %v299 = vmul.f32 %v296, 1.442695
    %v300 = vpow.pop %v299
    %v301 = vsel %vm288, %v298, 0.0
    %302 = vadd.xlane.f32.xlu0 %v301
    %v303 = vpop.xlane.xlu0 %302
    %v304 = vsel %vm288, %v300, 0.0
    %305 = vadd.xlane.f32.xlu0 %v304
    %v306 = vpop.xlane.xlu0 %305
    %v307 = vrcp.pop %v303
    %v308 = vmul.f32 %v298, %v307
    %v309 = vrcp.pop %v306
    %v310 = vmul.f32 %v300, %v309
    %vm311 = vcmask 64512
    %v313 = vsel %vm311, %v308, 0
    %315 = vmatprep.subr.mxu0 0.0
    %316 = vmatpush1.msra.mxu0 0.0
    %317 = vmatprep.subr.mxu0 0.0
    %318 = vmatpush1.msra.mxu0 0.0
    %319 = vmatprep.subr.mxu0 0.0
    %320 = vmatpush1.msra.mxu0 0.0
    %321 = vmatprep.subr.mxu0 0.0
    %322 = vmatpush1.msra.mxu0 0.0
    %323 = vmatprep.subr.mxu0 0.0
    %324 = vmatpush1.msra.mxu0 0.0
    %325 = vmatprep.subr.mxu0 0.0
    %326 = vmatpush1.msra.mxu0 0.0
    %327 = vmatprep.subr.mxu0 0.0
    %328 = vmatpush1.msra.mxu0 0.0
    %329 = vmatprep.subr.mxu0 0.0
    %330 = vmatpush1.msra.mxu0 0.0
    %331 = vmatprep.subr.mxu0 0.0
    %332 = vmatpush1.msra.mxu0 0.0
    %333 = vmatprep.subr.mxu0 0.0
    %334 = vmatpush1.msra.mxu0 0.0
    %335 = vmatprep.subr.mxu0 0.0
    %336 = vmatpush1.msra.mxu0 0.0
    %337 = vmatprep.subr.mxu0 0.0
    %338 = vmatpush1.msra.mxu0 0.0
    %339 = vmatprep.subr.mxu0 0.0
    %340 = vmatpush1.msra.mxu0 0.0
    %341 = vmatprep.subr.mxu0 0.0
    %342 = vmatpush1.msra.mxu0 0.0
    %343 = vmatprep.subr.mxu0 0.0
    %344 = vmatpush1.msra.mxu0 0.0
    %345 = vmatprep.subr.mxu0 0.0
    %346 = vmatpush1.msra.mxu0 %v130
    %347 = vmatprep.subr.mxu0 0.0
    %348 = vmatpush2.msra.mxu0 0.0
    %349 = vmatprep.subr.mxu0 0.0
    %350 = vmatpush2.msra.mxu0 0.0
    %351 = vmatprep.subr.mxu0 0.0
    %352 = vmatpush2.msra.mxu0 0.0
    %353 = vmatprep.subr.mxu0 0.0
    %354 = vmatpush2.msra.mxu0 0.0
    %355 = vmatprep.subr.mxu0 0.0
    %356 = vmatpush2.msra.mxu0 0.0
    %357 = vmatprep.subr.mxu0 0.0
    %358 = vmatpush2.msra.mxu0 0.0
    %359 = vmatprep.subr.mxu0 0.0
    %360 = vmatpush2.msra.mxu0 0.0
    %361 = vmatprep.subr.mxu0 0.0
    %362 = vmatpush2.msra.mxu0 0.0
    %363 = vmatprep.subr.mxu0 0.0
    %364 = vmatpush2.msra.mxu0 0.0
    %365 = vmatprep.subr.mxu0 0.0
    %366 = vmatpush2.msra.mxu0 0.0
    %367 = vmatprep.subr.mxu0 0.0
    %368 = vmatpush2.msra.mxu0 0.0
    %369 = vmatprep.subr.mxu0 0.0
    %370 = vmatpush2.msra.mxu0 0.0
    %371 = vmatprep.subr.mxu0 0.0
    %372 = vmatpush2.msra.mxu0 0.0
    %373 = vmatprep.subr.mxu0 0.0
    %374 = vmatpush2.msra.mxu0 0.0
    %375 = vmatprep.subr.mxu0 0.0
    %376 = vmatpush2.msra.mxu0 0.0
    %377 = vmatprep.subr.mxu0 0.0
    %378 = vmatpush2.msra.mxu0 0.0
    %379 = vmatprep.mubr.f32.mxu0 0.0
    %380 = vmatmul.mubr.f32.gmra.mxu0 %v313
    %v381 = vpop.f32.mrf.mxu0
    %v382 = vadd.f32 0.0, %v381
    %v383 = vpop.f32.mrf.mxu0
    %384 = vdwg.mxu0
    %v386 = vsel %vm311, %v310, 0
    %388 = vmatprep.subr.mxu0 0.0
    %389 = vmatpush1.msra.mxu0 0.0
    %390 = vmatprep.subr.mxu0 0.0
    %391 = vmatpush1.msra.mxu0 0.0
    %392 = vmatprep.subr.mxu0 0.0
    %393 = vmatpush1.msra.mxu0 0.0
    %394 = vmatprep.subr.mxu0 0.0
    %395 = vmatpush1.msra.mxu0 0.0
    %396 = vmatprep.subr.mxu0 0.0
    %397 = vmatpush1.msra.mxu0 0.0
    %398 = vmatprep.subr.mxu0 0.0
    %399 = vmatpush1.msra.mxu0 0.0
    %400 = vmatprep.subr.mxu0 0.0
    %401 = vmatpush1.msra.mxu0 0.0
    %402 = vmatprep.subr.mxu0 0.0
    %403 = vmatpush1.msra.mxu0 0.0
    %404 = vmatprep.subr.mxu0 0.0
    %405 = vmatpush1.msra.mxu0 0.0
    %406 = vmatprep.subr.mxu0 0.0
    %407 = vmatpush1.msra.mxu0 0.0
    %408 = vmatprep.subr.mxu0 0.0
    %409 = vmatpush1.msra.mxu0 0.0
    %410 = vmatprep.subr.mxu0 0.0
    %411 = vmatpush1.msra.mxu0 0.0
    %412 = vmatprep.subr.mxu0 0.0
    %413 = vmatpush1.msra.mxu0 0.0
    %414 = vmatprep.subr.mxu0 0.0
    %415 = vmatpush1.msra.mxu0 0.0
    %416 = vmatprep.subr.mxu0 0.0
    %417 = vmatpush1.msra.mxu0 0.0
    %418 = vmatprep.subr.mxu0 0.0
    %419 = vmatpush1.msra.mxu0 %v131
    %420 = vmatprep.subr.mxu0 0.0
    %421 = vmatpush2.msra.mxu0 0.0
    %422 = vmatprep.subr.mxu0 0.0
    %423 = vmatpush2.msra.mxu0 0.0
    %424 = vmatprep.subr.mxu0 0.0
    %425 = vmatpush2.msra.mxu0 0.0
    %426 = vmatprep.subr.mxu0 0.0
    %427 = vmatpush2.msra.mxu0 0.0
    %428 = vmatprep.subr.mxu0 0.0
    %429 = vmatpush2.msra.mxu0 0.0
    %430 = vmatprep.subr.mxu0 0.0
    %431 = vmatpush2.msra.mxu0 0.0
    %432 = vmatprep.subr.mxu0 0.0
    %433 = vmatpush2.msra.mxu0 0.0
    %434 = vmatprep.subr.mxu0 0.0
    %435 = vmatpush2.msra.mxu0 0.0
    %436 = vmatprep.subr.mxu0 0.0
    %437 = vmatpush2.msra.mxu0 0.0
    %438 = vmatprep.subr.mxu0 0.0
    %439 = vmatpush2.msra.mxu0 0.0
    %440 = vmatprep.subr.mxu0 0.0
    %441 = vmatpush2.msra.mxu0 0.0
    %442 = vmatprep.subr.mxu0 0.0
    %443 = vmatpush2.msra.mxu0 0.0
    %444 = vmatprep.subr.mxu0 0.0
    %445 = vmatpush2.msra.mxu0 0.0
    %446 = vmatprep.subr.mxu0 0.0
    %447 = vmatpush2.msra.mxu0 0.0
    %448 = vmatprep.subr.mxu0 0.0
    %449 = vmatpush2.msra.mxu0 0.0
    %450 = vmatprep.subr.mxu0 0.0
    %451 = vmatpush2.msra.mxu0 0.0
    %452 = vmatprep.mubr.f32.mxu0 0.0
    %453 = vmatmul.mubr.f32.gmra.mxu0 %v386
    %v454 = vpop.f32.mrf.mxu0
    %v455 = vadd.f32 0.0, %v454
    %v456 = vpop.f32.mrf.mxu0
    %457 = vdwg.mxu0
    %v458 = vrot.slane %v131, 7
    %v459 = vsel %vm108, %v458, %v130
    %s461 = scalar_lea.vmem [#allocation6], %s39
    %462 = vst.msk [vmem:[%s461] sm:$0x3] %vm112, %v459
    %v465 = vrot.slane %v455, 7
    %v466 = vsel %vm108, %v465, %v382
    %467 = vrot.lane.b32.xlu0 %v466, 32
    %v468 = vpop.permute.xlu0 %467
    %470 = vst.msk [vmem:[%s461] sm:$0x3] %vm120, %v468
    %vm471 = vcmask 1042434
    %v472 = vsel %vm471, %v465, %v382
    %473 = vrot.lane.b32.xlu0 %v472, 64
    %v474 = vpop.permute.xlu0 %473
    %vm476 = vcmask 780801
    %477 = vst.msk [vmem:[%s461 - $0x1] sm:$0x6] %vm476, %v474
    %p478 = scmp.eq.s32.totalorder 0, 0
    // Predicated region
    $region26: #{emma_forward.1} parent=1 // pred_check
      %p479 = pneg %p478
    $region27: #{emma_forward.1} parent=1 // pred_check_branch
      %481 = sbr.rel (%p479) target = $region29
    $region28: #{emma_forward.1} parent=1 // pred_region
      %v482 = vld [vmem:[#allocation5] sm:$0x3]
      %v483 = vld [vmem:[#allocation6] sm:$0x3]
      %vm484 = vcmask 785408
      %v486 = vsel %vm484, %v482, 0
      %v489 = vsel %vm484, %v483, 0
      %491 = vmatprep.subr.mxu0 0.0
      %492 = vmatpush1.xpose.msra.mxu0 0.0
      %493 = vmatprep.subr.mxu0 0.0
      %494 = vmatpush1.xpose.msra.mxu0 0.0
      %495 = vmatprep.subr.mxu0 0.0
      %496 = vmatpush1.xpose.msra.mxu0 0.0
      %497 = vmatprep.subr.mxu0 0.0
      %498 = vmatpush1.xpose.msra.mxu0 0.0
      %499 = vmatprep.subr.mxu0 0.0
      %500 = vmatpush1.xpose.msra.mxu0 0.0
      %501 = vmatprep.subr.mxu0 0.0
      %502 = vmatpush1.xpose.msra.mxu0 0.0
      %503 = vmatprep.subr.mxu0 0.0
      %504 = vmatpush1.xpose.msra.mxu0 0.0
      %505 = vmatprep.subr.mxu0 0.0
      %506 = vmatpush1.xpose.msra.mxu0 0.0
      %507 = vmatprep.subr.mxu0 0.0
      %508 = vmatpush1.xpose.msra.mxu0 0.0
      %509 = vmatprep.subr.mxu0 0.0
      %510 = vmatpush1.xpose.msra.mxu0 0.0
      %511 = vmatprep.subr.mxu0 0.0
      %512 = vmatpush1.xpose.msra.mxu0 0.0
      %513 = vmatprep.subr.mxu0 0.0
      %514 = vmatpush1.xpose.msra.mxu0 0.0
      %515 = vmatprep.subr.mxu0 0.0
      %516 = vmatpush1.xpose.msra.mxu0 0.0
      %517 = vmatprep.subr.mxu0 0.0
      %518 = vmatpush1.xpose.msra.mxu0 0.0
      %519 = vmatprep.subr.mxu0 0.0
      %520 = vmatpush1.xpose.msra.mxu0 0.0
      %521 = vmatprep.subr.mxu0 0.0
      %522 = vmatpush1.xpose.msra.mxu0 %v489
      %523 = vmatprep.subr.mxu0 0.0
      %524 = vmatpush2.xpose.msra.mxu0 0.0
      %525 = vmatprep.subr.mxu0 0.0
      %526 = vmatpush2.xpose.msra.mxu0 0.0
      %527 = vmatprep.subr.mxu0 0.0
      %528 = vmatpush2.xpose.msra.mxu0 0.0
      %529 = vmatprep.subr.mxu0 0.0
      %530 = vmatpush2.xpose.msra.mxu0 0.0
      %531 = vmatprep.subr.mxu0 0.0
      %532 = vmatpush2.xpose.msra.mxu0 0.0
      %533 = vmatprep.subr.mxu0 0.0
      %534 = vmatpush2.xpose.msra.mxu0 0.0
      %535 = vmatprep.subr.mxu0 0.0
      %536 = vmatpush2.xpose.msra.mxu0 0.0
      %537 = vmatprep.subr.mxu0 0.0
      %538 = vmatpush2.xpose.msra.mxu0 0.0
      %539 = vmatprep.subr.mxu0 0.0
      %540 = vmatpush2.xpose.msra.mxu0 0.0
      %541 = vmatprep.subr.mxu0 0.0
      %542 = vmatpush2.xpose.msra.mxu0 0.0
      %543 = vmatprep.subr.mxu0 0.0
      %544 = vmatpush2.xpose.msra.mxu0 0.0
      %545 = vmatprep.subr.mxu0 0.0
      %546 = vmatpush2.xpose.msra.mxu0 0.0
      %547 = vmatprep.subr.mxu0 0.0
      %548 = vmatpush2.xpose.msra.mxu0 0.0
      %549 = vmatprep.subr.mxu0 0.0
      %550 = vmatpush2.xpose.msra.mxu0 0.0
      %551 = vmatprep.subr.mxu0 0.0
      %552 = vmatpush2.xpose.msra.mxu0 0.0
      %553 = vmatprep.subr.mxu0 0.0
      %554 = vmatpush2.xpose.msra.mxu0 0.0
      %555 = vmatprep.mubr.f32.mxu0 0.0
      %556 = vmatmul.mubr.f32.gmra.mxu0 %v486
      %v557 = vpop.f32.mrf.mxu0
      %v558 = vadd.f32 0.0, %v557
      %v559 = vpop.f32.mrf.mxu0
      %560 = vdwg.mxu0
      %v561 = vmul.f32 %v482, %v482
      %vm562 = vcmask 779264
      %v563 = vsel %vm562, %v561, 0.0
      %564 = vadd.xlane.f32.xlu0 %v563
      %v565 = vpop.xlane.xlu0 %564
      %v566 = vrsqrt.pop %v565
      %v567 = vmin.f32 %v566, 1e+08
      %v568 = vmul.f32 %v483, %v483
      %v569 = vsel %vm562, %v568, 0.0
      %570 = vadd.xlane.f32.xlu0 %v569
      %v571 = vpop.xlane.xlu0 %570
      %v572 = vrsqrt.pop %v571
      %v573 = vmin.f32 %v572, 1e+08
      %v574 = vmul.f32 %v558, %v567
      %575 = vxpose.xlu0.b32.start [1/16] %v573, 128
      %576 = vxpose.xlu0.b32.cont [2/16] 0.0, 128
      %577 = vxpose.xlu0.b32.cont [3/16] 0.0, 128
      %578 = vxpose.xlu0.b32.cont [4/16] 0.0, 128
      %579 = vxpose.xlu0.b32.cont [5/16] 0.0, 128
      %580 = vxpose.xlu0.b32.cont [6/16] 0.0, 128
      %581 = vxpose.xlu0.b32.cont [7/16] 0.0, 128
      %582 = vxpose.xlu0.b32.cont [8/16] 0.0, 128
      %583 = vxpose.xlu0.b32.cont [9/16] 0.0, 128
      %584 = vxpose.xlu0.b32.cont [10/16] 0.0, 128
      %585 = vxpose.xlu0.b32.cont [11/16] 0.0, 128
      %586 = vxpose.xlu0.b32.cont [12/16] 0.0, 128
      %587 = vxpose.xlu0.b32.cont [13/16] 0.0, 128
      %588 = vxpose.xlu0.b32.cont [14/16] 0.0, 128
      %589 = vxpose.xlu0.b32.cont [15/16] 0.0, 128
      %590 = vxpose.xlu0.b32.end [16/16] 0.0, 128
      %v591 = vpop.trf.xlu0
      %v592 = vpop.trf.xlu0
      %v593 = vpop.trf.xlu0
      %v594 = vpop.trf.xlu0
      %v595 = vpop.trf.xlu0
      %v596 = vpop.trf.xlu0
      %v597 = vpop.trf.xlu0
      %v598 = vpop.trf.xlu0
      %v599 = vpop.trf.xlu0
      %v600 = vpop.trf.xlu0
      %v601 = vpop.trf.xlu0
      %v602 = vpop.trf.xlu0
      %v603 = vpop.trf.xlu0
      %v604 = vpop.trf.xlu0
      %v605 = vpop.trf.xlu0
      %v606 = vpop.trf.xlu0
      %v607 = vlaneseq
      %v608 = vshrl.u32 %v607, 7
      %v609 = vsub.s32 0, %v608
      %v610 = vrot.slane %v591, %v609
      %v611 = vmul.f32 %v574, %v610
      %v612 = vmul.f32 %v611, 50.0
      %v613 = vlaneseq
      %v614 = vshrl.u32 %v613, 7
      %vm615 = vcmp.eq.s32.totalorder %v614, %v284
      %v616 = vsel %vm615, %v612, 0.0
      %vm617 = vcmask 9216
      %v618 = vsel %vm617, %v616, 0.0
      %619 = vadd.xlane.f32.xlu0 %v618
      %v620 = vpop.xlane.xlu0 %619
      %v621 = vsel %vm617, %v612, -inf
      %622 = vmax.xlane.f32.xlu0 %v621
      %v623 = vpop.xlane.xlu0 %622
      %v624 = vsub.f32 %v612, %v623
      %v625 = vmul.f32 %v624, 1.442695
      %v626 = vpow.pop %v625
      %v627 = vsel %vm617, %v626, 0.0
      %628 = vadd.xlane.f32.xlu0 %v627
      %v629 = vpop.xlane.xlu0 %628
      %v630 = vlog2.pop %v629
      %v631 = vmul.f32 %v630, 0.6931472
      %v632 = vadd.f32 %v631, %v623
      %v633 = vsub.f32 %v632, %v620
      %vm634 = vcmask 1041408
      %v635 = vsel %vm634, %v633, 0.0
      %v636 = vrot.slane %v635, 4
      %v637 = vadd.f32 %v635, %v636
      %v638 = vrot.slane %v637, 2
      %v639 = vadd.f32 %v637, %v638
      %v640 = vrot.slane %v639, 1
      %v641 = vadd.f32 %v639, %v640
      %v642 = vmul.f32 %v641, 0.5
      %vm643 = vcmask 0
      %644 = vst.msk [vmem:[#allocation8] sm:$0x1] %vm643, %v642
    $region29: #{emma_forward.1} parent=1 // pred_fallthru
      _
    // Predicated region
    $region30: #{emma_forward.1} parent=1 // pred_check
      _
    $region31: #{emma_forward.1} parent=1 // pred_check_branch
      %646 = sbr.rel (0) target = $region33
    $region32: #{emma_forward.1} parent=1 // pred_region
      %s648 = ssub.s32 32, 32
      %649 = vsyncadd [#allocation4], %s648
      %s651 = sshll.u32 [#allocation5], 4
      %s652 = int_to_ptr.vmem [resolvable:$true] %s651
      %654 = dma.vmem_to_hbm [thread:$0]  %s652, 32, %s5, [#allocation4]
    $region33: #{emma_forward.1} parent=1 // pred_fallthru
      _
    // Predicated region
    $region34: #{emma_forward.1} parent=1 // pred_check
      _
    $region35: #{emma_forward.1} parent=1 // pred_check_branch
      %656 = sbr.rel (0) target = $region37
    $region36: #{emma_forward.1} parent=1 // pred_region
      %s658 = ssub.s32 32, 32
      %659 = vsyncadd [#allocation7], %s658
      %s661 = sshll.u32 [#allocation6], 4
      %s662 = int_to_ptr.vmem [resolvable:$true] %s661
      %664 = dma.vmem_to_hbm [thread:$0]  %s662, 32, %s6, [#allocation7]
    $region37: #{emma_forward.1} parent=1 // pred_fallthru
      _
    // Predicated region
    $region38: #{emma_forward.1} parent=1 // pred_check
      _
    $region39: #{emma_forward.1} parent=1 // pred_check_branch
      %666 = sbr.rel (0) target = $region41
    $region40: #{emma_forward.1} parent=1 // pred_region
      %s668 = ssub.s32 16, 16
      %669 = vsyncadd [#allocation7], %s668
      %s671 = sshll.u32 [#allocation8], 4
      %s672 = int_to_ptr.vmem [resolvable:$true] %s671
      %674 = dma.vmem_to_hbm [thread:$0]  %s672, 16, %s7, [#allocation7]
    $region41: #{emma_forward.1} parent=1 // pred_fallthru
      _
    // Predicated region
    $region42: #{emma_forward.1} parent=1 // pred_check
      _
    $region43: #{emma_forward.1} parent=1 // pred_check_branch
      %676 = sbr.rel (0) target = $region45
    $region44: #{emma_forward.1} parent=1 // pred_region
      %677 = dma.done [#allocation4], 32
    $region45: #{emma_forward.1} parent=1 // pred_fallthru
      _
    // Predicated region
    $region46: #{emma_forward.1} parent=1 // pred_check
      _
    $region47: #{emma_forward.1} parent=1 // pred_check_branch
      %679 = sbr.rel (0) target = $region49
    $region48: #{emma_forward.1} parent=1 // pred_region
      %680 = dma.done [#allocation7], 32
    $region49: #{emma_forward.1} parent=1 // pred_fallthru
      _
    // Predicated region
    $region50: #{emma_forward.1} parent=1 // pred_check
      _
    $region51: #{emma_forward.1} parent=1 // pred_check_branch
      %682 = sbr.rel (0) target = $region53
    $region52: #{emma_forward.1} parent=1 // pred_region
      %683 = dma.done [#allocation7], 16
    $region53: #{emma_forward.1} parent=1 // pred_fallthru
      _
    %684 = vsyncpa [#allocation3], 1
    %685 = vsyncpa [#allocation4], 1
    %686 = vsyncpa [#allocation7], 1

</llo_original>
